<compile_context>
chip_gen: v7x
topology: tpu7x:2x2x1
jax: 0.10.0
libtpu: 0.0.40
codegen_flags: <defaults>
</compile_context>

<pallas_src>
import math

import jax
import jax.numpy as jnp
from jax.experimental import pallas as pl
from jax.experimental.pallas import tpu as pltpu

# ~4 MiB per block -> ~16 MiB resident with double-buffered in + out, which is
# safe under the default/raised scoped-VMEM limit on v5e / v6e / v7x.
_MAX_BLOCK_BYTES = 4 * 1024 * 1024


def _copy_kernel(x_ref, o_ref):
    # Pure identity copy of the current lane-dense block.
    o_ref[...] = x_ref[...]


@jax.jit
def noop_forward(x):
    """Identity (no-op) forward implemented as a Pallas TPU kernel.

    The wrapper flattens the input to a lane-dense 2D slab (last dim a
    multiple of 128 whenever possible) so stores are full-width `vst`s, tiles
    it with large blocks over a single grid axis, and aliases the output onto
    the input buffer so no extra HBM allocation is required.
    """
    orig_shape = x.shape
    total = math.prod(orig_shape) if orig_shape else 1

    # Pick a lane-dense column width (multiple of 128) that divides the total
    # element count; otherwise fall back to one full-extent row (always legal
    # because the block spans the full array dims).
    cols = total
    for cand in (2048, 1024, 512, 256, 128):
        if total % cand == 0:
            cols = cand
            break
    rows = total // cols
    x2 = x.reshape(rows, cols)

    row_bytes = cols * jnp.dtype(x.dtype).itemsize
    if rows <= 8 or rows * row_bytes <= _MAX_BLOCK_BYTES:
        block_rows = rows                      # single block (full extent)
    else:
        block_rows = max(8, (_MAX_BLOCK_BYTES // row_bytes) // 8 * 8)
    grid = (pl.cdiv(rows, block_rows),)

    y2 = pl.pallas_call(
        _copy_kernel,
        out_shape=jax.ShapeDtypeStruct((rows, cols), x.dtype),
        grid=grid,
        in_specs=[pl.BlockSpec((block_rows, cols), lambda i: (i, 0))],
        out_specs=pl.BlockSpec((block_rows, cols), lambda i: (i, 0)),
        # Alias output onto the input buffer: no new HBM allocation for the
        # result of this identity op.
        input_output_aliases={0: 0},
        compiler_params=pltpu.CompilerParams(
            dimension_semantics=("parallel",),
            vmem_limit_bytes=32 * 1024 * 1024,
        ),
    )(x2)
    return y2.reshape(orig_shape)


if __name__ == "__main__":
    key = jax.random.PRNGKey(0)
    # Small NCHW input consistent with a generic vision-style module.
    x = jax.random.normal(key, (2, 4, 16, 16), dtype=jnp.float32)

    y = noop_forward(x)
    y = jax.block_until_ready(y)

    assert y.shape == x.shape and y.dtype == x.dtype
    assert bool(jnp.array_equal(y, x))
    print("KERNEL_OK")
</pallas_src>

<mosaic_0001>
module attributes {stable_mosaic.version = 11 : i64} {
  func.func @_copy_kernel(%arg0: i32, %arg1: memref<1x2048xf32, #tpu.memory_space<vmem>>, %arg2: memref<1x2048xf32, #tpu.memory_space<vmem>>) attributes {dimension_semantics = [#tpu.dimension_semantics<parallel>], iteration_bounds = array<i64: 1>, scalar_prefetch = 0 : i64, scratch_operands = 0 : i64, tpu.core_type = #tpu.core_type<tc>, window_params = [{transform_indices = @transform_0, window_bounds = array<i64: 1, 2048>}, {transform_indices = @transform_1, window_bounds = array<i64: 1, 2048>}]} {
    %c0 = arith.constant 0 : index
    %c0_0 = arith.constant 0 : index
    %0 = vector.load %arg1[%c0, %c0_0] : memref<1x2048xf32, #tpu.memory_space<vmem>>, vector<1x2048xf32>
    %c0_1 = arith.constant 0 : index
    %c0_2 = arith.constant 0 : index
    %1 = vector.load %arg2[%c0_1, %c0_2] : memref<1x2048xf32, #tpu.memory_space<vmem>>, vector<1x2048xf32>
    tpu.vector_store %arg2[%c0_1, %c0_2], %0 {strides = array<i32>} : memref<1x2048xf32, #tpu.memory_space<vmem>>, vector<1x2048xf32>,
    return
  }
  func.func @transform_0(%arg0: i32) -> (i32, i32) {
    %c0_i32 = arith.constant 0 : i32
    %c0_i32_0 = arith.constant 0 : i32
    return %arg0, %c0_i32 : i32, i32
  }
  func.func @transform_1(%arg0: i32) -> (i32, i32) {
    %c0_i32 = arith.constant 0 : i32
    %c0_i32_0 = arith.constant 0 : i32
    return %arg0, %c0_i32 : i32, i32
  }
}

</mosaic_0001>

<llo_original>
// kernel: noop_forward.1
$region0: #{noop_forward.1}
  #allocation0 [shape = 'u32[]', space=smem, size = 0x4, offset = 0x4, fixed_abs, tag = 'smem constant byte address 0x4 - core index']
  #allocation1 [shape = 'u32[144,128]{1,0:T(1,128)}', space=vmem, size = 0x12000, scoped, tag = 'internal scratch']
  %s0 = inlined_call_operand.vmem [shape: f32[1,2048], index: 0, kind: input, shape index: {}, may-alias: {0,1}]
  %s1 = inlined_call_operand.vmem [shape: f32[1,2048], index: 1, kind: output, shape index: {}, may-alias: {0,1}]
  %s2 = sld [smem:[#allocation0]]
  $region14: #{noop_forward.1} parent=0
    _
  %s4 = ssub.s32 1, %s2
  %s5 = scalar_select 0, %s4, %s2
  // Predicated region
  $region2: #{noop_forward.1} parent=0 // pred_check
    _
  $region3: #{noop_forward.1} parent=0 // pred_check_branch
    %7 = sbr.rel (0) target = $region5
  $region4: #{noop_forward.1} parent=0 // pred_region
    _
  $region5: #{noop_forward.1} parent=0 // pred_fallthru
    _
  %v8 = vld [vmem:[%s0] sm:$0xff]
  %v9 = vld [vmem:[%s0 + $0x8] sm:$0xff]
  %10 = vst [vmem:[%s1] sm:$0xff] %v8
  %11 = vst [vmem:[%s1 + $0x8] sm:$0xff] %v9
  // Predicated region
  $region6: #{noop_forward.1} parent=0 // pred_check
    _
  $region7: #{noop_forward.1} parent=0 // pred_check_branch
    %13 = sbr.rel (0) target = $region9
  $region8: #{noop_forward.1} parent=0 // pred_region
    _
  $region9: #{noop_forward.1} parent=0 // pred_fallthru
    _
  // Predicated region
  $region10: #{noop_forward.1} parent=0 // pred_check
    _
  $region11: #{noop_forward.1} parent=0 // pred_check_branch
    %15 = sbr.rel (0) target = $region13
  $region12: #{noop_forward.1} parent=0 // pred_region
    _
  $region13: #{noop_forward.1} parent=0 // pred_fallthru
    _

</llo_original>
